<compile_context>
chip_gen: v6e
topology: v6e:2x2x1
jax: 0.10.0
libtpu: 0.0.40
codegen_flags: <defaults>
</compile_context>

<pallas_src>
import math

import jax
import jax.numpy as jnp
from jax.experimental import pallas as pl
from jax.experimental.pallas import tpu as pltpu

_EPS = 1e-8


def _round_up(x, m):
    return ((x + m - 1) // m) * m


def _pad2d(a, rows, cols):
    pr, pc = rows - a.shape[0], cols - a.shape[1]
    if pr == 0 and pc == 0:
        return a
    return jnp.pad(a, ((0, pr), (0, pc)))


def _pick_tiles(B, n_in, n_out):
    # M tile: whole (padded) batch when small, else 128-row tiles.
    tm = 128 if B >= 128 else 8 * ((B + 7) // 8)
    # K / N tiles: 128 lanes minimum, grow for big layers (still << VMEM).
    tk = 512 if n_in > 512 else 128
    tn = 512 if n_out > 512 else 128
    return tm, tn, tk


def _complex_linear_kernel(xr_ref, xi_ref, wt_ref, mb_ref,
                           m_ref, psi_re_ref, psi_im_ref,
                           stacked_ref, acc_ref):
    k = pl.program_id(2)
    tm = xr_ref.shape[0]

    @pl.when(k == 0)
    def _init():
        acc_ref[...] = jnp.zeros_like(acc_ref)

    xr = xr_ref[...]                      # (tm, tk) f32
    xi = xi_ref[...]                      # (tm, tk) f32
    x_abs = jnp.sqrt(xr * xr + xi * xi)   # EUP sqrt, off the MXU critical path

    # Stack [xr; xi; |x|] so the shared weight tile is pushed to the MXU once.
    cdt = stacked_ref.dtype
    stacked_ref[0 * tm:1 * tm, :] = xr.astype(cdt)
    stacked_ref[1 * tm:2 * tm, :] = xi.astype(cdt)
    stacked_ref[2 * tm:3 * tm, :] = x_abs.astype(cdt)

    acc_ref[...] += jnp.dot(stacked_ref[...], wt_ref[...],
                            preferred_element_type=jnp.float32)

    # Epilogue only after the full K reduction.
    @pl.when(k == pl.num_programs(2) - 1)
    def _finalize():
        mb = mb_ref[...]                              # (1, tn) broadcasts
        psi_re = acc_ref[0 * tm:1 * tm, :]
        psi_im = acc_ref[1 * tm:2 * tm, :]
        chi = acc_ref[2 * tm:3 * tm, :] + mb
        m_psi = jnp.sqrt(psi_re * psi_re + psi_im * psi_im) + mb
        m_ref[...] = 0.5 * m_psi + 0.5 * chi
        psi_re_ref[...] = psi_re
        # get_stable_angle: clamp tiny imaginary parts to +eps.
        psi_im_ref[...] = jnp.where((psi_im < _EPS) & (psi_im > -_EPS),
                                    jnp.float32(_EPS), psi_im)


def complex_linear_forward(x_real, x_imag, weight, magnitude_bias, phase_bias,
                           *, compute_dtype=jnp.float32):
    """x_real/x_imag: (B, n_in) f32; weight: (n_out, n_in) (nn.Linear layout);
    magnitude_bias/phase_bias: (1, n_out).  Returns (m, phi_psi), (B, n_out)."""
    B, n_in = x_real.shape
    n_out = weight.shape[0]

    tm, tn, tk = _pick_tiles(B, n_in, n_out)
    M = _round_up(B, tm)
    N = _round_up(n_out, tn)
    K = _round_up(n_in, tk)

    # --- parameter / input preparation (in production: once at init time) ---
    wt = _pad2d(weight.T.astype(compute_dtype), K, N)          # (K, N)
    mb = _pad2d(magnitude_bias.astype(jnp.float32), 1, N)      # (1, N)
    xr = _pad2d(x_real.astype(jnp.float32), M, K)              # (M, K)
    xi = _pad2d(x_imag.astype(jnp.float32), M, K)              # (M, K)

    grid = (M // tm, N // tn, K // tk)

    out_shape = (
        jax.ShapeDtypeStruct((M, N), jnp.float32),  # m
        jax.ShapeDtypeStruct((M, N), jnp.float32),  # psi_re
        jax.ShapeDtypeStruct((M, N), jnp.float32),  # psi_im (stabilized)
    )

    m_p, psi_re_p, psi_im_p = pl.pallas_call(
        _complex_linear_kernel,
        out_shape=out_shape,
        grid_spec=pltpu.PrefetchScalarGridSpec(
            num_scalar_prefetch=0,
            grid=grid,
            in_specs=[
                pl.BlockSpec((tm, tk), lambda i, j, k: (i, k)),   # x_real
                pl.BlockSpec((tm, tk), lambda i, j, k: (i, k)),   # x_imag
                pl.BlockSpec((tk, tn), lambda i, j, k: (k, j)),   # weight^T
                pl.BlockSpec((1, tn), lambda i, j, k: (0, j)),    # mag bias
            ],
            out_specs=[
                pl.BlockSpec((tm, tn), lambda i, j, k: (i, j)),
                pl.BlockSpec((tm, tn), lambda i, j, k: (i, j)),
                pl.BlockSpec((tm, tn), lambda i, j, k: (i, j)),
            ],
            scratch_shapes=[
                pltpu.VMEM((3 * tm, tk), compute_dtype),   # stacked LHS
                pltpu.VMEM((3 * tm, tn), jnp.float32),     # f32 accumulator
            ],
        ),
        compiler_params=pltpu.CompilerParams(
            dimension_semantics=("parallel", "parallel", "arbitrary"),
            vmem_limit_bytes=32 * 1024 * 1024,
        ),
    )(xr, xi, wt, mb)

    m = m_p[:B, :n_out]
    psi_re = psi_re_p[:B, :n_out]
    psi_im = psi_im_p[:B, :n_out]

    # TODO(synk): angle computed outside the kernel (no guaranteed Mosaic
    #             lowering for arctan2); phase_bias added here too.
    phi_psi = jnp.arctan2(psi_im, psi_re) + phase_bias
    return m, phi_psi


def _reference_forward(x_real, x_imag, weight, magnitude_bias, phase_bias):
    hp = jax.lax.Precision.HIGHEST
    wt = weight.T
    psi_re = jnp.dot(x_real, wt, precision=hp)
    psi_im = jnp.dot(x_imag, wt, precision=hp)
    m_psi = jnp.sqrt(psi_re ** 2 + psi_im ** 2) + magnitude_bias
    psi_im_s = jnp.where((psi_im < _EPS) & (psi_im > -_EPS), _EPS, psi_im)
    phi_psi = jnp.arctan2(psi_im_s, psi_re) + phase_bias
    chi = jnp.dot(jnp.sqrt(x_real ** 2 + x_imag ** 2), wt, precision=hp)
    chi = chi + magnitude_bias
    m = 0.5 * m_psi + 0.5 * chi
    return m, phi_psi


if __name__ == "__main__":
    key = jax.random.PRNGKey(0)
    k_xr, k_xi, k_w, k_mb, k_pb = jax.random.split(key, 5)

    # Small but non-trivially shaped: exercises K accumulation (2 K tiles),
    # 2 N tiles, and M/N/K padding.
    B, n_in, n_out = 20, 160, 200

    x_real = jax.random.normal(k_xr, (B, n_in), dtype=jnp.float32)
    x_imag = jax.random.normal(k_xi, (B, n_in), dtype=jnp.float32)

    # nn.Linear(n_in, n_out, bias=False) weight: (n_out, n_in)
    bound = 1.0 / math.sqrt(n_in)
    weight = jax.random.uniform(k_w, (n_out, n_in), dtype=jnp.float32,
                                minval=-bound, maxval=bound)
    magnitude_bias = jax.random.uniform(k_mb, (1, n_out), dtype=jnp.float32,
                                        minval=-bound, maxval=bound)
    # Module inits phase_bias to 0; use a small nonzero one to exercise the add.
    phase_bias = 0.1 * jax.random.normal(k_pb, (1, n_out), dtype=jnp.float32)

    m, phi = complex_linear_forward(x_real, x_imag, weight,
                                    magnitude_bias, phase_bias)
    jax.block_until_ready((m, phi))

    m_ref, phi_ref = _reference_forward(x_real, x_imag, weight,
                                        magnitude_bias, phase_bias)

    assert m.shape == (B, n_out) and phi.shape == (B, n_out)
    assert jnp.allclose(m, m_ref, atol=1e-4, rtol=1e-4), "magnitude mismatch"
    assert jnp.allclose(phi, phi_ref, atol=1e-4, rtol=1e-4), "phase mismatch"

    print("KERNEL_OK")
</pallas_src>

<mosaic_0001>
module attributes {stable_mosaic.version = 11 : i64} {
  func.func @_complex_linear_kernel(%arg0: i32, %arg1: i32, %arg2: i32, %arg3: memref<24x128xf32, #tpu.memory_space<vmem>>, %arg4: memref<24x128xf32, #tpu.memory_space<vmem>>, %arg5: memref<128x128xf32, #tpu.memory_space<vmem>>, %arg6: memref<1x128xf32, #tpu.memory_space<vmem>>, %arg7: memref<24x128xf32, #tpu.memory_space<vmem>>, %arg8: memref<24x128xf32, #tpu.memory_space<vmem>>, %arg9: memref<24x128xf32, #tpu.memory_space<vmem>>, %arg10: memref<72x128xf32, #tpu.memory_space<vmem>>, %arg11: memref<72x128xf32, #tpu.memory_space<vmem>>) attributes {dimension_semantics = [#tpu.dimension_semantics<parallel>, #tpu.dimension_semantics<parallel>, #tpu.dimension_semantics<arbitrary>], iteration_bounds = array<i64: 1, 2, 2>, scalar_prefetch = 0 : i64, scratch_operands = 2 : i64, tpu.core_type = #tpu.core_type<tc>, window_params = [{transform_indices = @transform_0, window_bounds = array<i64: 24, 128>}, {transform_indices = @transform_1, window_bounds = array<i64: 24, 128>}, {transform_indices = @transform_2, window_bounds = array<i64: 128, 128>}, {transform_indices = @transform_3, window_bounds = array<i64: 1, 128>}, {transform_indices = @transform_4, window_bounds = array<i64: 24, 128>}, {transform_indices = @transform_5, window_bounds = array<i64: 24, 128>}, {transform_indices = @transform_6, window_bounds = array<i64: 24, 128>}]} {
    %c0_i32 = arith.constant 0 : i32
    %0 = arith.cmpi eq, %arg2, %c0_i32 : i32
    %1 = arith.extui %0 : i1 to i32
    %c0_i32_0 = arith.constant 0 : i32
    %2 = arith.cmpi ne, %1, %c0_i32_0 : i32
    scf.if %2 {
      %cst_17 = arith.constant 0.000000e+00 : f32
      %21 = vector.broadcast %cst_17 : f32 to vector<72x128xf32>
      %c0_18 = arith.constant 0 : index
      %c0_19 = arith.constant 0 : index
      %22 = vector.load %arg11[%c0_18, %c0_19] : memref<72x128xf32, #tpu.memory_space<vmem>>, vector<72x128xf32>
      tpu.vector_store %arg11[%c0_18, %c0_19], %21 {strides = array<i32>} : memref<72x128xf32, #tpu.memory_space<vmem>>, vector<72x128xf32>,
    } else {
    }
    %c0 = arith.constant 0 : index
    %c0_1 = arith.constant 0 : index
    %3 = vector.load %arg3[%c0, %c0_1] : memref<24x128xf32, #tpu.memory_space<vmem>>, vector<24x128xf32>
    %c0_2 = arith.constant 0 : index
    %c0_3 = arith.constant 0 : index
    %4 = vector.load %arg4[%c0_2, %c0_3] : memref<24x128xf32, #tpu.memory_space<vmem>>, vector<24x128xf32>
    %5 = arith.mulf %3, %3 : vector<24x128xf32>
    %6 = arith.mulf %4, %4 : vector<24x128xf32>
    %7 = arith.addf %5, %6 : vector<24x128xf32>
    %8 = math.sqrt %7 : vector<24x128xf32>
    %c0_4 = arith.constant 0 : index
    %c0_5 = arith.constant 0 : index
    %9 = vector.load %arg10[%c0_4, %c0_5] : memref<72x128xf32, #tpu.memory_space<vmem>>, vector<24x128xf32>
    tpu.vector_store %arg10[%c0_4, %c0_5], %3 {strides = array<i32>} : memref<72x128xf32, #tpu.memory_space<vmem>>, vector<24x128xf32>,
    %c24 = arith.constant 24 : index
    %c0_6 = arith.constant 0 : index
    %10 = vector.load %arg10[%c24, %c0_6] : memref<72x128xf32, #tpu.memory_space<vmem>>, vector<24x128xf32>
    tpu.vector_store %arg10[%c24, %c0_6], %4 {strides = array<i32>} : memref<72x128xf32, #tpu.memory_space<vmem>>, vector<24x128xf32>,
    %c48 = arith.constant 48 : index
    %c0_7 = arith.constant 0 : index
    %11 = vector.load %arg10[%c48, %c0_7] : memref<72x128xf32, #tpu.memory_space<vmem>>, vector<24x128xf32>
    tpu.vector_store %arg10[%c48, %c0_7], %8 {strides = array<i32>} : memref<72x128xf32, #tpu.memory_space<vmem>>, vector<24x128xf32>,
    %c0_8 = arith.constant 0 : index
    %c0_9 = arith.constant 0 : index
    %12 = vector.load %arg11[%c0_8, %c0_9] : memref<72x128xf32, #tpu.memory_space<vmem>>, vector<72x128xf32>
    %c0_10 = arith.constant 0 : index
    %c0_11 = arith.constant 0 : index
    %13 = vector.load %arg10[%c0_10, %c0_11] : memref<72x128xf32, #tpu.memory_space<vmem>>, vector<72x128xf32>
    %c0_12 = arith.constant 0 : index
    %c0_13 = arith.constant 0 : index
    %14 = vector.load %arg5[%c0_12, %c0_13] : memref<128x128xf32, #tpu.memory_space<vmem>>, vector<128x128xf32>
    %cst = arith.constant dense<0.000000e+00> : vector<72x128xf32>
    %15 = tpu.matmul %13, %14, %cst {dimension_numbers = #tpu.dot_dimension_numbers<[1], [0], [0], [1], [0, 0, 1, 1], [], []>} : vector<72x128xf32>, vector<128x128xf32>, vector<72x128xf32> -> vector<72x128xf32>
    %16 = arith.addf %12, %15 : vector<72x128xf32>
    %c0_14 = arith.constant 0 : index
    %c0_15 = arith.constant 0 : index
    %17 = vector.load %arg11[%c0_14, %c0_15] : memref<72x128xf32, #tpu.memory_space<vmem>>, vector<72x128xf32>
    tpu.vector_store %arg11[%c0_14, %c0_15], %16 {strides = array<i32>} : memref<72x128xf32, #tpu.memory_space<vmem>>, vector<72x128xf32>,
    %c1_i32 = arith.constant 1 : i32
    %18 = arith.cmpi eq, %arg2, %c1_i32 : i32
    %19 = arith.extui %18 : i1 to i32
    %c0_i32_16 = arith.constant 0 : i32
    %20 = arith.cmpi ne, %19, %c0_i32_16 : i32
    scf.if %20 {
      %c0_17 = arith.constant 0 : index
      %c0_18 = arith.constant 0 : index
      %21 = vector.load %arg6[%c0_17, %c0_18] : memref<1x128xf32, #tpu.memory_space<vmem>>, vector<1x128xf32>
      %c0_19 = arith.constant 0 : index
      %c0_20 = arith.constant 0 : index
      %22 = vector.load %arg11[%c0_19, %c0_20] : memref<72x128xf32, #tpu.memory_space<vmem>>, vector<24x128xf32>
      %c24_21 = arith.constant 24 : index
      %c0_22 = arith.constant 0 : index
      %23 = vector.load %arg11[%c24_21, %c0_22] : memref<72x128xf32, #tpu.memory_space<vmem>>, vector<24x128xf32>
      %c48_23 = arith.constant 48 : index
      %c0_24 = arith.constant 0 : index
      %24 = vector.load %arg11[%c48_23, %c0_24] : memref<72x128xf32, #tpu.memory_space<vmem>>, vector<24x128xf32>
      %25 = vector.broadcast %21 : vector<1x128xf32> to vector<24x128xf32>
      %26 = arith.addf %24, %25 : vector<24x128xf32>
      %27 = arith.mulf %22, %22 : vector<24x128xf32>
      %28 = arith.mulf %23, %23 : vector<24x128xf32>
      %29 = arith.addf %27, %28 : vector<24x128xf32>
      %30 = math.sqrt %29 : vector<24x128xf32>
      %31 = vector.broadcast %21 : vector<1x128xf32> to vector<24x128xf32>
      %32 = arith.addf %30, %31 : vector<24x128xf32>
      %cst_25 = arith.constant 5.000000e-01 : f32
      %33 = vector.broadcast %cst_25 : f32 to vector<24x128xf32>
      %34 = arith.mulf %33, %32 : vector<24x128xf32>
      %cst_26 = arith.constant 5.000000e-01 : f32
      %35 = vector.broadcast %cst_26 : f32 to vector<24x128xf32>
      %36 = arith.mulf %35, %26 : vector<24x128xf32>
      %37 = arith.addf %34, %36 : vector<24x128xf32>
      %c0_27 = arith.constant 0 : index
      %c0_28 = arith.constant 0 : index
      %38 = vector.load %arg7[%c0_27, %c0_28] : memref<24x128xf32, #tpu.memory_space<vmem>>, vector<24x128xf32>
      tpu.vector_store %arg7[%c0_27, %c0_28], %37 {strides = array<i32>} : memref<24x128xf32, #tpu.memory_space<vmem>>, vector<24x128xf32>,
      %c0_29 = arith.constant 0 : index
      %c0_30 = arith.constant 0 : index
      %39 = vector.load %arg8[%c0_29, %c0_30] : memref<24x128xf32, #tpu.memory_space<vmem>>, vector<24x128xf32>
      tpu.vector_store %arg8[%c0_29, %c0_30], %22 {strides = array<i32>} : memref<24x128xf32, #tpu.memory_space<vmem>>, vector<24x128xf32>,
      %cst_31 = arith.constant 9.99999993E-9 : f32
      %40 = vector.broadcast %cst_31 : f32 to vector<24x128xf32>
      %41 = arith.cmpf olt, %23, %40 : vector<24x128xf32>
      %cst_32 = arith.constant -9.99999993E-9 : f32
      %42 = vector.broadcast %cst_32 : f32 to vector<24x128xf32>
      %43 = arith.cmpf ogt, %23, %42 : vector<24x128xf32>
      %44 = arith.andi %41, %43 : vector<24x128xi1>
      %cst_33 = arith.constant 9.99999993E-9 : f32
      %45 = vector.broadcast %cst_33 : f32 to vector<24x128xf32>
      %46 = arith.select %44, %45, %23 : vector<24x128xi1>, vector<24x128xf32>
      %c0_34 = arith.constant 0 : index
      %c0_35 = arith.constant 0 : index
      %47 = vector.load %arg9[%c0_34, %c0_35] : memref<24x128xf32, #tpu.memory_space<vmem>>, vector<24x128xf32>
      tpu.vector_store %arg9[%c0_34, %c0_35], %46 {strides = array<i32>} : memref<24x128xf32, #tpu.memory_space<vmem>>, vector<24x128xf32>,
    } else {
    }
    return
  }
  func.func @transform_0(%arg0: i32, %arg1: i32, %arg2: i32) -> (i32, i32) {
    %c0_i32 = arith.constant 0 : i32
    return %arg0, %arg2 : i32, i32
  }
  func.func @transform_1(%arg0: i32, %arg1: i32, %arg2: i32) -> (i32, i32) {
    %c0_i32 = arith.constant 0 : i32
    return %arg0, %arg2 : i32, i32
  }
  func.func @transform_2(%arg0: i32, %arg1: i32, %arg2: i32) -> (i32, i32) {
    %c0_i32 = arith.constant 0 : i32
    return %arg2, %arg1 : i32, i32
  }
  func.func @transform_3(%arg0: i32, %arg1: i32, %arg2: i32) -> (i32, i32) {
    %c0_i32 = arith.constant 0 : i32
    %c0_i32_0 = arith.constant 0 : i32
    return %c0_i32, %arg1 : i32, i32
  }
  func.func @transform_4(%arg0: i32, %arg1: i32, %arg2: i32) -> (i32, i32) {
    %c0_i32 = arith.constant 0 : i32
    return %arg0, %arg1 : i32, i32
  }
  func.func @transform_5(%arg0: i32, %arg1: i32, %arg2: i32) -> (i32, i32) {
    %c0_i32 = arith.constant 0 : i32
    return %arg0, %arg1 : i32, i32
  }
  func.func @transform_6(%arg0: i32, %arg1: i32, %arg2: i32) -> (i32, i32) {
    %c0_i32 = arith.constant 0 : i32
    return %arg0, %arg1 : i32, i32
  }
}

</mosaic_0001>

<llo_original>
// kernel: tpu_custom_call.1
$region0: #{tpu_custom_call.1}
  #allocation0 [shape = 'u32[]', space=smem, size = 0x4, offset = 0x4, fixed_abs, tag = 'smem constant byte address 0x4 - core index']
  #allocation1 [shape = 'u32[144,128]{1,0:T(1,128)}', space=vmem, size = 0x12000, scoped, tag = 'internal scratch']
  #allocation2 [shape = 'f32[72,128]{1,0:T(8,128)}', space=vmem, size = 0x9000, scoped, tag = 'scratch operand']
  #allocation3 [shape = 'f32[72,128]{1,0:T(8,128)}', space=vmem, size = 0x9000, scoped, tag = 'scratch operand']
  %s0 = inlined_call_operand.hbm [shape: f32[24,256], index: 0, kind: input, shape index: {}]
  %s1 = inlined_call_operand.hbm [shape: f32[24,256], index: 1, kind: input, shape index: {}]
  %s2 = inlined_call_operand.hbm [shape: f32[256,256], index: 2, kind: input, shape index: {}]
  %s3 = inlined_call_operand.vmem [shape: f32[1,256], index: 3, kind: input, shape index: {}]
  %s4 = inlined_call_operand.hbm [shape: f32[24,256], index: 4, kind: output, shape index: {0}]
  %s5 = inlined_call_operand.hbm [shape: f32[24,256], index: 5, kind: output, shape index: {1}]
  %s6 = inlined_call_operand.hbm [shape: f32[24,256], index: 6, kind: output, shape index: {2}]
  %7 = xla_tuple %s4, %s5, %s6
  %s8 = sld [smem:[#allocation0]]
  $region85: #{tpu_custom_call.1} parent=0
    _
  %s10 = ssub.s32 1, %s8
  %s11 = scalar_select 0, %s10, %s8
  $region1: #{tpu_custom_call.1} parent=0
    #allocation4 [shape = 'u8[24576]{0}', space=vmem, size = 0x6000, scoped, tag = 'input window, operand 0']
    #allocation5 [shape = 's32[2]{0}', space=sflag, size = 0x8, scoped, tag = 'scoped memory for tpu_custom_call.1']
    #allocation6 [shape = 's32[2]{0}', space=sflag, size = 0x8, scoped, tag = 'scoped memory for tpu_custom_call.1']
    #allocation7 [shape = 'u8[24576]{0}', space=vmem, size = 0x6000, scoped, tag = 'input window, operand 1']
    #allocation8 [shape = 's32[2]{0}', space=sflag, size = 0x8, scoped, tag = 'scoped memory for tpu_custom_call.1']
    #allocation9 [shape = 'u8[131072]{0}', space=vmem, size = 0x20000, scoped, tag = 'input window, operand 2']
    #allocation10 [shape = 'u8[24576]{0}', space=vmem, size = 0x6000, scoped, tag = 'output window, operand 0']
    #allocation11 [shape = 'u8[24576]{0}', space=vmem, size = 0x6000, scoped, tag = 'output window, operand 1']
    #allocation12 [shape = 's32[2]{0}', space=sflag, size = 0x8, scoped, tag = 'scoped memory for tpu_custom_call.1']
    #allocation13 [shape = 'u8[24576]{0}', space=vmem, size = 0x6000, scoped, tag = 'output window, operand 2']
    %12 = vsyncpa [#allocation5], 0
    %s13 = scalar_lea.sflag [#allocation5], 1
    %14 = vsyncpa %s13, 0
    %15 = vsyncpa [#allocation8], 0
    %s16 = scalar_lea.sflag [#allocation8], 1
    %17 = vsyncpa %s16, 0
    %18 = vsyncpa [#allocation6], 0
    %s19 = scalar_lea.sflag [#allocation6], 1
    %20 = vsyncpa %s19, 0
    %21 = vsyncpa [#allocation12], 0
    %s22 = scalar_lea.sflag [#allocation12], 1
    %23 = vsyncpa %s22, 0
    loop: start=0, step=1, limit=6
    $region2: #{tpu_custom_call.1} parent=1 // loop_pre_header
      _
    $region3: #{tpu_custom_call.1} parent=1 // loop_header
      %s25 = sphi 0, %s29
      %p26 = scmp.ge.s32.totalorder %s25, 6
      %s32 = sphi 0, %s51
      %s33 = sphi 0, %s47
      %s34 = sphi 0, %s43
      %s35 = sphi 0, %s32
      %s36 = sphi 0, %s33
      %s37 = sphi 0, %s34
      %s38 = sphi 0, %s35
      %s39 = sphi 0, %s36
      %s40 = sphi 0, %s37
      %s56 = sphi 0, %s58
      %s59 = sphi 0, %s56
      %s60 = sphi 0, %s59
      %s76 = sphi 0, %s60
      %s84 = sphi 0, %s86
      %s87 = sphi 0, %s84
      %s88 = sphi 0, %s87
      %s104 = sphi 0, %s88
      %s112 = sphi 0, %s114
      %s115 = sphi 0, %s112
      %s116 = sphi 0, %s115
      %s132 = sphi 0, %s116
      %s138 = sphi 0, %s140
      %s141 = sphi 0, %s138
      %s142 = sphi 0, %s141
      %s158 = sphi 0, %s142
      %s166 = sphi 0, %s168
      %s169 = sphi 0, %s166
      %s170 = sphi 0, %s169
      %s186 = sphi 0, %s170
      %s194 = sphi 0, %s196
      %s197 = sphi 0, %s194
      %s198 = sphi 0, %s197
      %s214 = sphi 0, %s198
      %s222 = sphi 0, %s224
      %s225 = sphi 0, %s222
      %s226 = sphi 0, %s225
      %s242 = sphi 0, %s226
    $region4: #{tpu_custom_call.1} parent=1 // loop_header_branch
      %28 = sbr.rel (%p26) target = $region8
    $region5: #{tpu_custom_call.1} parent=1 // loop_body
      %s30 = ssub.s32 %s25, 1
      %s31 = ssub.s32 %s25, 2
      %s41 = sadd.s32 1, %s34
      %p42 = scmp.ge.s32.totalorder %s41, 2
      %s43 = scalar_select %p42, 0, %s41
      %s44 = sadd.s32 1, %s33
      %s45 = scalar_select %p42, %s44, %s33
      %p46 = scmp.ge.s32.totalorder %s45, 2
      %s47 = scalar_select %p46, 0, %s45
      %s48 = sadd.s32 1, %s32
      %s49 = scalar_select %p46, %s48, %s32
      %p50 = scmp.ge.s32.totalorder %s49, 1
      %s51 = scalar_select %p50, 0, %s49
      %s52 = ssub.s32 %s32, %s51
      %s53 = ssub.s32 %s34, %s43
      %s54 = sor.u32 %s52, %s53
      %p55 = scmp.eq.s32.totalorder %s54, 0
      %s57 = sadd.s32 %s56, 1
      %s58 = scalar_select %p55, %s56, %s57
      %p61 = pneg %p55
      %p62 = scmp.eq.s32.totalorder %s25, 3
      %p63 = por %p61, %p62
      %p64 = scmp.ne.s32.totalorder %s56, %s59
      %p65 = scmp.eq.s32.totalorder %s25, 0
      %p66 = por %p64, %p65
      %p67 = scmp.ne.s32.totalorder %s56, %s59
      %p68 = scmp.eq.s32.totalorder %s30, 3
      %p69 = por %p67, %p68
      %p70 = scmp.ne.s32.totalorder %s59, %s60
      %p71 = scmp.eq.s32.totalorder %s30, 0
      %p72 = por %p70, %p71
      %p73 = scmp.ne.s32.totalorder %s59, %s60
      %p74 = scmp.eq.s32.totalorder %s31, 3
      %p75 = por %p73, %p74
      %p77 = scmp.ne.s32.totalorder %s60, %s76
      %p78 = scmp.eq.s32.totalorder %s31, 0
      %p79 = por %p77, %p78
      %s80 = ssub.s32 %s32, %s51
      %s81 = ssub.s32 %s34, %s43
      %s82 = sor.u32 %s80, %s81
      %p83 = scmp.eq.s32.totalorder %s82, 0
      %s85 = sadd.s32 %s84, 1
      %s86 = scalar_select %p83, %s84, %s85
      %p89 = pneg %p83
      %p90 = scmp.eq.s32.totalorder %s25, 3
      %p91 = por %p89, %p90
      %p92 = scmp.ne.s32.totalorder %s84, %s87
      %p93 = scmp.eq.s32.totalorder %s25, 0
      %p94 = por %p92, %p93
      %p95 = scmp.ne.s32.totalorder %s84, %s87
      %p96 = scmp.eq.s32.totalorder %s30, 3
      %p97 = por %p95, %p96
      %p98 = scmp.ne.s32.totalorder %s87, %s88
      %p99 = scmp.eq.s32.totalorder %s30, 0
      %p100 = por %p98, %p99
      %p101 = scmp.ne.s32.totalorder %s87, %s88
      %p102 = scmp.eq.s32.totalorder %s31, 3
      %p103 = por %p101, %p102
      %p105 = scmp.ne.s32.totalorder %s88, %s104
      %p106 = scmp.eq.s32.totalorder %s31, 0
      %p107 = por %p105, %p106
      %s108 = ssub.s32 %s34, %s43
      %s109 = ssub.s32 %s33, %s47
      %s110 = sor.u32 %s108, %s109
      %p111 = scmp.eq.s32.totalorder %s110, 0
      %s113 = sadd.s32 %s112, 1
      %s114 = scalar_select %p111, %s112, %s113
      %p117 = pneg %p111
      %p118 = scmp.eq.s32.totalorder %s25, 3
      %p119 = por %p117, %p118
      %p120 = scmp.ne.s32.totalorder %s112, %s115
      %p121 = scmp.eq.s32.totalorder %s25, 0
      %p122 = por %p120, %p121
      %p123 = scmp.ne.s32.totalorder %s112, %s115
      %p124 = scmp.eq.s32.totalorder %s30, 3
      %p125 = por %p123, %p124
      %p126 = scmp.ne.s32.totalorder %s115, %s116
      %p127 = scmp.eq.s32.totalorder %s30, 0
      %p128 = por %p126, %p127
      %p129 = scmp.ne.s32.totalorder %s115, %s116
      %p130 = scmp.eq.s32.totalorder %s31, 3
      %p131 = por %p129, %p130
      %p133 = scmp.ne.s32.totalorder %s116, %s132
      %p134 = scmp.eq.s32.totalorder %s31, 0
      %p135 = por %p133, %p134
      %s136 = ssub.s32 %s33, %s47
      %p137 = scmp.eq.s32.totalorder %s136, 0
      %s139 = sadd.s32 %s138, 1
      %s140 = scalar_select %p137, %s138, %s139
      %p143 = pneg %p137
      %p144 = scmp.eq.s32.totalorder %s25, 3
      %p145 = por %p143, %p144
      %p146 = scmp.ne.s32.totalorder %s138, %s141
      %p147 = scmp.eq.s32.totalorder %s25, 0
      %p148 = por %p146, %p147
      %p149 = scmp.ne.s32.totalorder %s138, %s141
      %p150 = scmp.eq.s32.totalorder %s30, 3
      %p151 = por %p149, %p150
      %p152 = scmp.ne.s32.totalorder %s141, %s142
      %p153 = scmp.eq.s32.totalorder %s30, 0
      %p154 = por %p152, %p153
      %p155 = scmp.ne.s32.totalorder %s141, %s142
      %p156 = scmp.eq.s32.totalorder %s31, 3
      %p157 = por %p155, %p156
      %p159 = scmp.ne.s32.totalorder %s142, %s158
      %p160 = scmp.eq.s32.totalorder %s31, 0
      %p161 = por %p159, %p160
      %s162 = ssub.s32 %s32, %s51
      %s163 = ssub.s32 %s33, %s47
      %s164 = sor.u32 %s162, %s163
      %p165 = scmp.eq.s32.totalorder %s164, 0
      %s167 = sadd.s32 %s166, 1
      %s168 = scalar_select %p165, %s166, %s167
      %p171 = pneg %p165
      %p172 = scmp.eq.s32.totalorder %s25, 3
      %p173 = por %p171, %p172
      %p174 = scmp.ne.s32.totalorder %s166, %s169
      %p175 = scmp.eq.s32.totalorder %s25, 0
      %p176 = por %p174, %p175
      %p177 = scmp.ne.s32.totalorder %s166, %s169
      %p178 = scmp.eq.s32.totalorder %s30, 3
      %p179 = por %p177, %p178
      %p180 = scmp.ne.s32.totalorder %s169, %s170
      %p181 = scmp.eq.s32.totalorder %s30, 0
      %p182 = por %p180, %p181
      %p183 = scmp.ne.s32.totalorder %s169, %s170
      %p184 = scmp.eq.s32.totalorder %s31, 3
      %p185 = por %p183, %p184
      %p187 = scmp.ne.s32.totalorder %s170, %s186
      %p188 = scmp.eq.s32.totalorder %s31, 0
      %p189 = por %p187, %p188
      %s190 = ssub.s32 %s32, %s51
      %s191 = ssub.s32 %s33, %s47
      %s192 = sor.u32 %s190, %s191
      %p193 = scmp.eq.s32.totalorder %s192, 0
      %s195 = sadd.s32 %s194, 1
      %s196 = scalar_select %p193, %s194, %s195
      %p199 = pneg %p193
      %p200 = scmp.eq.s32.totalorder %s25, 3
      %p201 = por %p199, %p200
      %p202 = scmp.ne.s32.totalorder %s194, %s197
      %p203 = scmp.eq.s32.totalorder %s25, 0
      %p204 = por %p202, %p203
      %p205 = scmp.ne.s32.totalorder %s194, %s197
      %p206 = scmp.eq.s32.totalorder %s30, 3
      %p207 = por %p205, %p206
      %p208 = scmp.ne.s32.totalorder %s197, %s198
      %p209 = scmp.eq.s32.totalorder %s30, 0
      %p210 = por %p208, %p209
      %p211 = scmp.ne.s32.totalorder %s197, %s198
      %p212 = scmp.eq.s32.totalorder %s31, 3
      %p213 = por %p211, %p212
      %p215 = scmp.ne.s32.totalorder %s198, %s214
      %p216 = scmp.eq.s32.totalorder %s31, 0
      %p217 = por %p215, %p216
      %s218 = ssub.s32 %s32, %s51
      %s219 = ssub.s32 %s33, %s47
      %s220 = sor.u32 %s218, %s219
      %p221 = scmp.eq.s32.totalorder %s220, 0
      %s223 = sadd.s32 %s222, 1
      %s224 = scalar_select %p221, %s222, %s223
      %p227 = pneg %p221
      %p228 = scmp.eq.s32.totalorder %s25, 3
      %p229 = por %p227, %p228
      %p230 = scmp.ne.s32.totalorder %s222, %s225
      %p231 = scmp.eq.s32.totalorder %s25, 0
      %p232 = por %p230, %p231
      %p233 = scmp.ne.s32.totalorder %s222, %s225
      %p234 = scmp.eq.s32.totalorder %s30, 3
      %p235 = por %p233, %p234
      %p236 = scmp.ne.s32.totalorder %s225, %s226
      %p237 = scmp.eq.s32.totalorder %s30, 0
      %p238 = por %p236, %p237
      %p239 = scmp.ne.s32.totalorder %s225, %s226
      %p240 = scmp.eq.s32.totalorder %s31, 3
      %p241 = por %p239, %p240
      %p243 = scmp.ne.s32.totalorder %s226, %s242
      %p244 = scmp.eq.s32.totalorder %s31, 0
      %p245 = por %p243, %p244
      %p246 = scmp.le.s32.totalorder 1, %s25
      %p247 = scmp.lt.s32.totalorder %s25, 5
      %p248 = pnand %p246, %p247
      %p249 = pneg %p248
      // Predicated region
      $region9: #{tpu_custom_call.1} parent=5 // pred_check
        _
      $region10: #{tpu_custom_call.1} parent=5 // pred_check_branch
        %251 = sbr.rel (%p248) target = $region12
      $region11: #{tpu_custom_call.1} parent=5 // pred_region
        %s252 = ssub.s32 %s25, 1
      $region12: #{tpu_custom_call.1} parent=5 // pred_fallthru
        _
      %p253 = scmp.lt.s32.totalorder %s25, 4
      // Predicated region
      $region13: #{tpu_custom_call.1} parent=5 // pred_check
        %p254 = pneg %p253
      $region14: #{tpu_custom_call.1} parent=5 // pred_check_branch
        %256 = sbr.rel (%p254) target = $region16
      $region15: #{tpu_custom_call.1} parent=5 // pred_region
        // Predicated region
        $region17: #{tpu_custom_call.1} parent=15 // pred_check
          %p257 = pneg %p66
        $region18: #{tpu_custom_call.1} parent=15 // pred_check_branch
          %259 = sbr.rel (%p257) target = $region20
        $region19: #{tpu_custom_call.1} parent=15 // pred_region
          %s260 = sand.u32 %s56, 1
          %s261 = scalar_lea.sflag [#allocation5], %s260
          %s262 = sand.u32 %s56, 1
          %s263 = smul.addr %s262, 24
          %s264 = scalar_lea.vmem [#allocation4], %s263
          %s265 = smul.u32 3, %s32
          %s267 = ssub.s32 384, 384
          %268 = vsyncadd %s261, %s267
          %s269 = smul.addr %s265, 2
          %s270 = sadd.s32 %s34, %s269
          %s271 = smul.addr %s270, 128
          %s272 = scalar_lea.hbm %s0, %s271
          %s273 = sshll.u32 %s264, 4
          %s274 = int_to_ptr.vmem [resolvable:$true] %s273
          %279 = dma.hbm_to_vmem [thread:$0]  %s272, 384, %s274, %s261, 256, 128, 8
        $region20: #{tpu_custom_call.1} parent=15 // pred_fallthru
          _
        // Predicated region
        $region21: #{tpu_custom_call.1} parent=15 // pred_check
          %p280 = pneg %p94
        $region22: #{tpu_custom_call.1} parent=15 // pred_check_branch
          %282 = sbr.rel (%p280) target = $region24
        $region23: #{tpu_custom_call.1} parent=15 // pred_region
          %s283 = sand.u32 %s25, 1
          %s284 = scalar_lea.sflag [#allocation8], %s283
          %s285 = sand.u32 %s84, 1
          %s286 = smul.addr %s285, 24
          %s287 = scalar_lea.vmem [#allocation7], %s286
          %s288 = smul.u32 3, %s32
          %s290 = ssub.s32 384, 384
          %291 = vsyncadd %s284, %s290
          %s292 = smul.addr %s288, 2
          %s293 = sadd.s32 %s34, %s292
          %s294 = smul.addr %s293, 128
          %s295 = scalar_lea.hbm %s1, %s294
          %s296 = sshll.u32 %s287, 4
          %s297 = int_to_ptr.vmem [resolvable:$true] %s296
          %302 = dma.hbm_to_vmem [thread:$0]  %s295, 384, %s297, %s284, 256, 128, 8
        $region24: #{tpu_custom_call.1} parent=15 // pred_fallthru
          _
        // Predicated region
        $region25: #{tpu_custom_call.1} parent=15 // pred_check
          %p303 = pneg %p122
        $region26: #{tpu_custom_call.1} parent=15 // pred_check_branch
          %305 = sbr.rel (%p303) target = $region28
        $region27: #{tpu_custom_call.1} parent=15 // pred_region
          %s306 = sand.u32 %s25, 1
          %s307 = scalar_lea.sflag [#allocation8], %s306
          %s308 = sand.u32 %s112, 1
          %s309 = smul.addr %s308, 128
          %s310 = scalar_lea.vmem [#allocation9], %s309
          %s311 = smul.u32 16, %s34
          %s313 = ssub.s32 2048, 2048
          %314 = vsyncadd %s307, %s313
          %s315 = smul.addr %s311, 2
          %s316 = sadd.s32 %s33, %s315
          %s317 = smul.addr %s316, 128
          %s318 = scalar_lea.hbm %s2, %s317
          %s319 = sshll.u32 %s310, 4
          %s320 = int_to_ptr.vmem [resolvable:$true] %s319
          %325 = dma.hbm_to_vmem [thread:$0]  %s318, 2048, %s320, %s307, 256, 128, 8
        $region28: #{tpu_custom_call.1} parent=15 // pred_fallthru
          _
        // Predicated region
        $region29: #{tpu_custom_call.1} parent=15 // pred_check
          %p326 = pneg %p148
        $region30: #{tpu_custom_call.1} parent=15 // pred_check_branch
          %328 = sbr.rel (%p326) target = $region32
        $region31: #{tpu_custom_call.1} parent=15 // pred_region
          %p329 = scmp.lt.s32.totalorder %s33, 1
          %s330 = scalar_select %p329, %s33, 1
          %s331 = scalar_lea.vmem %s3, %s330
        $region32: #{tpu_custom_call.1} parent=15 // pred_fallthru
          _
      $region16: #{tpu_custom_call.1} parent=5 // pred_fallthru
        _
      %p332 = scmp.le.s32.totalorder 1, %s25
      %p333 = scmp.lt.s32.totalorder %s25, 5
      %p334 = pnand %p332, %p333
      %p335 = pneg %p334
      // Predicated region
      $region33: #{tpu_custom_call.1} parent=5 // pred_check
        _
      $region34: #{tpu_custom_call.1} parent=5 // pred_check_branch
        %337 = sbr.rel (%p334) target = $region36
      $region35: #{tpu_custom_call.1} parent=5 // pred_region
        %s338 = ssub.s32 %s25, 1
        %s339 = sand.u32 %s59, 1
        %s340 = scalar_lea.sflag [#allocation5], %s339
        %s341 = sand.u32 %s59, 1
        %s342 = smul.addr %s341, 24
        %s343 = scalar_lea.vmem [#allocation4], %s342
        // Predicated region
        $region37: #{tpu_custom_call.1} parent=35 // pred_check
          %p344 = pneg %p72
        $region38: #{tpu_custom_call.1} parent=35 // pred_check_branch
          %346 = sbr.rel (%p344) target = $region40
        $region39: #{tpu_custom_call.1} parent=35 // pred_region
          %347 = dma.done %s340, 384
        $region40: #{tpu_custom_call.1} parent=35 // pred_fallthru
          _
        %s348 = sand.u32 %s30, 1
        %s349 = scalar_lea.sflag [#allocation8], %s348
        %s350 = sand.u32 %s87, 1
        %s351 = smul.addr %s350, 24
        %s352 = scalar_lea.vmem [#allocation7], %s351
        // Predicated region
        $region41: #{tpu_custom_call.1} parent=35 // pred_check
          %p353 = pneg %p100
        $region42: #{tpu_custom_call.1} parent=35 // pred_check_branch
          %355 = sbr.rel (%p353) target = $region44
        $region43: #{tpu_custom_call.1} parent=35 // pred_region
          %356 = dma.done %s349, 384
        $region44: #{tpu_custom_call.1} parent=35 // pred_fallthru
          _
        %s357 = sand.u32 %s30, 1
        %s358 = scalar_lea.sflag [#allocation8], %s357
        %s359 = sand.u32 %s115, 1
        %s360 = smul.addr %s359, 128
        %s361 = scalar_lea.vmem [#allocation9], %s360
        // Predicated region
        $region45: #{tpu_custom_call.1} parent=35 // pred_check
          %p362 = pneg %p128
        $region46: #{tpu_custom_call.1} parent=35 // pred_check_branch
          %364 = sbr.rel (%p362) target = $region48
        $region47: #{tpu_custom_call.1} parent=35 // pred_region
          %365 = dma.done %s358, 2048
        $region48: #{tpu_custom_call.1} parent=35 // pred_fallthru
          _
        %s366 = sand.u32 %s59, 1
        %s367 = scalar_lea.sflag [#allocation5], %s366
        %s368 = sand.u32 %s59, 1
        %s369 = smul.addr %s368, 24
        %s370 = scalar_lea.vmem [#allocation4], %s369
        %p371 = pneg %p72
        %p372 = pneg %p69
        %s373 = sand.u32 %s30, 1
        %s374 = scalar_lea.sflag [#allocation8], %s373
        %s375 = sand.u32 %s87, 1
        %s376 = smul.addr %s375, 24
        %s377 = scalar_lea.vmem [#allocation7], %s376
        %p378 = pneg %p100
        %p379 = pneg %p97
        %s380 = sand.u32 %s30, 1
        %s381 = scalar_lea.sflag [#allocation8], %s380
        %s382 = sand.u32 %s115, 1
        %s383 = smul.addr %s382, 128
        %s384 = scalar_lea.vmem [#allocation9], %s383
        %p385 = pneg %p128
        %p386 = pneg %p125
        %p387 = scmp.lt.s32.totalorder %s36, 1
        %s388 = scalar_select %p387, %s36, 1
        %s389 = scalar_lea.vmem %s3, %s388
        %p390 = pneg %p154
        %p391 = pneg %p151
        %p392 = pneg %p182
        %p393 = pneg %p179
        %s394 = sand.u32 %s169, 1
        %s395 = scalar_lea.sflag [#allocation6], %s394
        %s396 = sand.u32 %s169, 1
        %s397 = smul.addr %s396, 24
        %s398 = scalar_lea.vmem [#allocation10], %s397
        %p399 = pneg %p210
        %p400 = pneg %p207
        %s401 = sand.u32 %s30, 1
        %s402 = scalar_lea.sflag [#allocation12], %s401
        %s403 = sand.u32 %s197, 1
        %s404 = smul.addr %s403, 24
        %s405 = scalar_lea.vmem [#allocation11], %s404
        %p406 = pneg %p238
        %p407 = pneg %p235
        %s408 = sand.u32 %s30, 1
        %s409 = scalar_lea.sflag [#allocation12], %s408
        %s410 = sand.u32 %s225, 1
        %s411 = smul.addr %s410, 24
        %s412 = scalar_lea.vmem [#allocation13], %s411
        %s413 = smul.u32 3, %s35
        %s414 = smul.u32 3, %s35
        %s415 = smul.u32 16, %s37
        %p416 = scmp.lt.s32.totalorder %s36, 1
        %s417 = scalar_select %p416, %s36, 1
        %s418 = scalar_lea.vmem %s3, %s417
        %s419 = smul.u32 3, %s35
        %s420 = smul.u32 3, %s35
        %s421 = smul.u32 3, %s35
        %p422 = scmp.eq.s32.totalorder %s37, 0
        // Predicated region
        $region49: #{tpu_custom_call.1} parent=35 // pred_check
          %p423 = pneg %p422
        $region50: #{tpu_custom_call.1} parent=35 // pred_check_branch
          %425 = sbr.rel (%p423) target = $region52
        $region51: #{tpu_custom_call.1} parent=35 // pred_region
          %426 = vst [vmem:[#allocation3] sm:$0xff] 0.0
          %427 = vst [vmem:[#allocation3 + $0x8] sm:$0xff] 0.0
          %428 = vst [vmem:[#allocation3 + $0x10] sm:$0xff] 0.0
          %429 = vst [vmem:[#allocation3 + $0x18] sm:$0xff] 0.0
          %430 = vst [vmem:[#allocation3 + $0x20] sm:$0xff] 0.0
          %431 = vst [vmem:[#allocation3 + $0x28] sm:$0xff] 0.0
          %432 = vst [vmem:[#allocation3 + $0x30] sm:$0xff] 0.0
          %433 = vst [vmem:[#allocation3 + $0x38] sm:$0xff] 0.0
          %434 = vst [vmem:[#allocation3 + $0x40] sm:$0xff] 0.0
        $region52: #{tpu_custom_call.1} parent=35 // pred_fallthru
          _
        %v435 = vld [vmem:[%s343] sm:$0xff]
        %v436 = vld [vmem:[%s343 + $0x8] sm:$0xff]
        %v437 = vld [vmem:[%s343 + $0x10] sm:$0xff]
        %v438 = vld [vmem:[%s352] sm:$0xff]
        %v439 = vld [vmem:[%s352 + $0x8] sm:$0xff]
        %v440 = vld [vmem:[%s352 + $0x10] sm:$0xff]
        %v441 = vmul.f32 %v435, %v435
        %v442 = vmul.f32 %v436, %v436
        %v443 = vmul.f32 %v437, %v437
        %v444 = vmul.f32 %v438, %v438
        %v445 = vmul.f32 %v439, %v439
        %v446 = vmul.f32 %v440, %v440
        %v447 = vadd.f32 %v441, %v444
        %v448 = vadd.f32 %v442, %v445
        %v449 = vadd.f32 %v443, %v446
        %v450 = vrsqrt.pop %v447
        %v451 = vmul.f32 %v447, %v450
        %vm452 = vcmp.eq.f32.partialorder %v447, inf
        %v453 = vsel %vm452, %v447, %v451
        %vm454 = vcmp.eq.f32.partialorder %v447, 0.0
        %v455 = vand.u32 %v447, 2147483648
        %v456 = vsel %vm454, %v455, %v453
        %v457 = vrsqrt.pop %v448
        %v458 = vmul.f32 %v448, %v457
        %vm459 = vcmp.eq.f32.partialorder %v448, inf
        %v460 = vsel %vm459, %v448, %v458
        %vm461 = vcmp.eq.f32.partialorder %v448, 0.0
        %v462 = vand.u32 %v448, 2147483648
        %v463 = vsel %vm461, %v462, %v460
        %v464 = vrsqrt.pop %v449
        %v465 = vmul.f32 %v449, %v464
        %vm466 = vcmp.eq.f32.partialorder %v449, inf
        %v467 = vsel %vm466, %v449, %v465
        %vm468 = vcmp.eq.f32.partialorder %v449, 0.0
        %v469 = vand.u32 %v449, 2147483648
        %v470 = vsel %vm468, %v469, %v467
        %471 = vst [vmem:[#allocation2] sm:$0xff] %v435
        %472 = vst [vmem:[#allocation2 + $0x8] sm:$0xff] %v436
        %473 = vst [vmem:[#allocation2 + $0x10] sm:$0xff] %v437
        %474 = vst [vmem:[#allocation2 + $0x18] sm:$0xff] %v438
        %475 = vst [vmem:[#allocation2 + $0x20] sm:$0xff] %v439
        %476 = vst [vmem:[#allocation2 + $0x28] sm:$0xff] %v440
        %477 = vst [vmem:[#allocation2 + $0x30] sm:$0xff] %v456
        %478 = vst [vmem:[#allocation2 + $0x38] sm:$0xff] %v463
        %479 = vst [vmem:[#allocation2 + $0x40] sm:$0xff] %v470
        %v480 = vld [vmem:[#allocation3] sm:$0xff]
        %v481 = vld [vmem:[#allocation3 + $0x8] sm:$0xff]
        %v482 = vld [vmem:[#allocation3 + $0x10] sm:$0xff]
        %v483 = vld [vmem:[#allocation3 + $0x18] sm:$0xff]
        %v484 = vld [vmem:[#allocation3 + $0x20] sm:$0xff]
        %v485 = vld [vmem:[#allocation3 + $0x28] sm:$0xff]
        %v486 = vld [vmem:[#allocation3 + $0x30] sm:$0xff]
        %v487 = vld [vmem:[#allocation3 + $0x38] sm:$0xff]
        %v488 = vld [vmem:[#allocation3 + $0x40] sm:$0xff]
        %v489 = vld [vmem:[#allocation2] sm:$0xff]
        %v490 = vld [vmem:[#allocation2 + $0x8] sm:$0xff]
        %v491 = vld [vmem:[#allocation2 + $0x10] sm:$0xff]
        %v492 = vld [vmem:[#allocation2 + $0x18] sm:$0xff]
        %v493 = vld [vmem:[#allocation2 + $0x20] sm:$0xff]
        %v494 = vld [vmem:[#allocation2 + $0x28] sm:$0xff]
        %v495 = vld [vmem:[#allocation2 + $0x30] sm:$0xff]
        %v496 = vld [vmem:[#allocation2 + $0x38] sm:$0xff]
        %v497 = vld [vmem:[#allocation2 + $0x40] sm:$0xff]
        %v498 = vld [vmem:[%s361] sm:$0xff]
        %v499 = vld [vmem:[%s361 + $0x8] sm:$0xff]
        %v500 = vld [vmem:[%s361 + $0x10] sm:$0xff]
        %v501 = vld [vmem:[%s361 + $0x18] sm:$0xff]
        %v502 = vld [vmem:[%s361 + $0x20] sm:$0xff]
        %v503 = vld [vmem:[%s361 + $0x28] sm:$0xff]
        %v504 = vld [vmem:[%s361 + $0x30] sm:$0xff]
        %v505 = vld [vmem:[%s361 + $0x38] sm:$0xff]
        %v506 = vld [vmem:[%s361 + $0x40] sm:$0xff]
        %v507 = vld [vmem:[%s361 + $0x48] sm:$0xff]
        %v508 = vld [vmem:[%s361 + $0x50] sm:$0xff]
        %v509 = vld [vmem:[%s361 + $0x58] sm:$0xff]
        %v510 = vld [vmem:[%s361 + $0x60] sm:$0xff]
        %v511 = vld [vmem:[%s361 + $0x68] sm:$0xff]
        %v512 = vld [vmem:[%s361 + $0x70] sm:$0xff]
        %v513 = vld [vmem:[%s361 + $0x78] sm:$0xff]
        %514 = vmatprep.subr.mxu0 0.0
        %515 = vmatpush1.msra.mxu0 %v513
        %516 = vmatprep.subr.mxu0 0.0
        %517 = vmatpush1.msra.mxu0 %v512
        %518 = vmatprep.subr.mxu0 0.0
        %519 = vmatpush1.msra.mxu0 %v511
        %520 = vmatprep.subr.mxu0 0.0
        %521 = vmatpush1.msra.mxu0 %v510
        %522 = vmatprep.subr.mxu0 0.0
        %523 = vmatpush1.msra.mxu0 %v509
        %524 = vmatprep.subr.mxu0 0.0
        %525 = vmatpush1.msra.mxu0 %v508
        %526 = vmatprep.subr.mxu0 0.0
        %527 = vmatpush1.msra.mxu0 %v507
        %528 = vmatprep.subr.mxu0 0.0
        %529 = vmatpush1.msra.mxu0 %v506
        %530 = vmatprep.subr.mxu0 0.0
        %531 = vmatpush1.msra.mxu0 %v505
        %532 = vmatprep.subr.mxu0 0.0
        %533 = vmatpush1.msra.mxu0 %v504
        %534 = vmatprep.subr.mxu0 0.0
        %535 = vmatpush1.msra.mxu0 %v503
        %536 = vmatprep.subr.mxu0 0.0
        %537 = vmatpush1.msra.mxu0 %v502
        %538 = vmatprep.subr.mxu0 0.0
        %539 = vmatpush1.msra.mxu0 %v501
        %540 = vmatprep.subr.mxu0 0.0
        %541 = vmatpush1.msra.mxu0 %v500
        %542 = vmatprep.subr.mxu0 0.0
        %543 = vmatpush1.msra.mxu0 %v499
        %544 = vmatprep.subr.mxu0 0.0
        %545 = vmatpush1.msra.mxu0 %v498
        %546 = vmatprep.subr.mxu0 0.0
        %547 = vmatpush2.msra.mxu0 0.0
        %548 = vmatprep.subr.mxu0 0.0
        %549 = vmatpush2.msra.mxu0 0.0
        %550 = vmatprep.subr.mxu0 0.0
        %551 = vmatpush2.msra.mxu0 0.0
        %552 = vmatprep.subr.mxu0 0.0
        %553 = vmatpush2.msra.mxu0 0.0
        %554 = vmatprep.subr.mxu0 0.0
        %555 = vmatpush2.msra.mxu0 0.0
        %556 = vmatprep.subr.mxu0 0.0
        %557 = vmatpush2.msra.mxu0 0.0
        %558 = vmatprep.subr.mxu0 0.0
        %559 = vmatpush2.msra.mxu0 0.0
        %560 = vmatprep.subr.mxu0 0.0
        %561 = vmatpush2.msra.mxu0 0.0
        %562 = vmatprep.subr.mxu0 0.0
        %563 = vmatpush2.msra.mxu0 0.0
        %564 = vmatprep.subr.mxu0 0.0
        %565 = vmatpush2.msra.mxu0 0.0
        %566 = vmatprep.subr.mxu0 0.0
        %567 = vmatpush2.msra.mxu0 0.0
        %568 = vmatprep.subr.mxu0 0.0
        %569 = vmatpush2.msra.mxu0 0.0
        %570 = vmatprep.subr.mxu0 0.0
        %571 = vmatpush2.msra.mxu0 0.0
        %572 = vmatprep.subr.mxu0 0.0
        %573 = vmatpush2.msra.mxu0 0.0
        %574 = vmatprep.subr.mxu0 0.0
        %575 = vmatpush2.msra.mxu0 0.0
        %576 = vmatprep.subr.mxu0 0.0
        %577 = vmatpush2.msra.mxu0 0.0
        %578 = vmatprep.mubr.f32.mxu0 0.0
        %579 = vmatmul.mubr.f32.gmra.mxu0 %v489
        %v580 = vpop.f32.mrf.mxu0
        %v581 = vadd.f32 0.0, %v580
        %v582 = vpop.f32.mrf.mxu0
        %583 = vmatprep.mubr.f32.mxu0 0.0
        %584 = vmatmul.mubr.f32.gmra.mxu0 %v490
        %v585 = vpop.f32.mrf.mxu0
        %v586 = vadd.f32 0.0, %v585
        %v587 = vpop.f32.mrf.mxu0
        %588 = vmatprep.mubr.f32.mxu0 0.0
        %589 = vmatmul.mubr.f32.gmra.mxu0 %v491
        %v590 = vpop.f32.mrf.mxu0
        %v591 = vadd.f32 0.0, %v590
        %v592 = vpop.f32.mrf.mxu0
        %593 = vmatprep.mubr.f32.mxu0 0.0
        %594 = vmatmul.mubr.f32.gmra.mxu0 %v492
        %v595 = vpop.f32.mrf.mxu0
        %v596 = vadd.f32 0.0, %v595
        %v597 = vpop.f32.mrf.mxu0
        %598 = vmatprep.mubr.f32.mxu0 0.0
        %599 = vmatmul.mubr.f32.gmra.mxu0 %v493
        %v600 = vpop.f32.mrf.mxu0
        %v601 = vadd.f32 0.0, %v600
        %v602 = vpop.f32.mrf.mxu0
        %603 = vmatprep.mubr.f32.mxu0 0.0
        %604 = vmatmul.mubr.f32.gmra.mxu0 %v494
        %v605 = vpop.f32.mrf.mxu0
        %v606 = vadd.f32 0.0, %v605
        %v607 = vpop.f32.mrf.mxu0
        %608 = vmatprep.mubr.f32.mxu0 0.0
        %609 = vmatmul.mubr.f32.gmra.mxu0 %v495
        %v610 = vpop.f32.mrf.mxu0
        %v611 = vadd.f32 0.0, %v610
        %v612 = vpop.f32.mrf.mxu0
        %613 = vmatprep.mubr.f32.mxu0 0.0
        %614 = vmatmul.mubr.f32.gmra.mxu0 %v496
        %v615 = vpop.f32.mrf.mxu0
        %v616 = vadd.f32 0.0, %v615
        %v617 = vpop.f32.mrf.mxu0
        %618 = vmatprep.mubr.f32.mxu0 0.0
        %619 = vmatmul.mubr.f32.gmra.mxu0 %v497
        %v620 = vpop.f32.mrf.mxu0
        %v621 = vadd.f32 0.0, %v620
        %v622 = vpop.f32.mrf.mxu0
        %623 = vdwg.mxu0
        %v624 = vadd.f32 %v480, %v581
        %v625 = vadd.f32 %v481, %v586
        %v626 = vadd.f32 %v482, %v591
        %v627 = vadd.f32 %v483, %v596
        %v628 = vadd.f32 %v484, %v601
        %v629 = vadd.f32 %v485, %v606
        %v630 = vadd.f32 %v486, %v611
        %v631 = vadd.f32 %v487, %v616
        %v632 = vadd.f32 %v488, %v621
        %633 = vst [vmem:[#allocation3] sm:$0xff] %v624
        %634 = vst [vmem:[#allocation3 + $0x8] sm:$0xff] %v625
        %635 = vst [vmem:[#allocation3 + $0x10] sm:$0xff] %v626
        %636 = vst [vmem:[#allocation3 + $0x18] sm:$0xff] %v627
        %637 = vst [vmem:[#allocation3 + $0x20] sm:$0xff] %v628
        %638 = vst [vmem:[#allocation3 + $0x28] sm:$0xff] %v629
        %639 = vst [vmem:[#allocation3 + $0x30] sm:$0xff] %v630
        %640 = vst [vmem:[#allocation3 + $0x38] sm:$0xff] %v631
        %641 = vst [vmem:[#allocation3 + $0x40] sm:$0xff] %v632
        %p642 = scmp.eq.s32.totalorder %s37, 1
        // Predicated region
        $region53: #{tpu_custom_call.1} parent=35 // pred_check
          %p643 = pneg %p642
        $region54: #{tpu_custom_call.1} parent=35 // pred_check_branch
          %645 = sbr.rel (%p643) target = $region56
        $region55: #{tpu_custom_call.1} parent=35 // pred_region
          %v646 = vld [vmem:[%s418] sm:$0x1]
          %v647 = vld [vmem:[#allocation3] sm:$0xff]
          %v648 = vld [vmem:[#allocation3 + $0x8] sm:$0xff]
          %v649 = vld [vmem:[#allocation3 + $0x10] sm:$0xff]
          %v650 = vld [vmem:[#allocation3 + $0x18] sm:$0xff]
          %v651 = vld [vmem:[#allocation3 + $0x20] sm:$0xff]
          %v652 = vld [vmem:[#allocation3 + $0x28] sm:$0xff]
          %v653 = vld [vmem:[#allocation3 + $0x30] sm:$0xff]
          %v654 = vld [vmem:[#allocation3 + $0x38] sm:$0xff]
          %v655 = vld [vmem:[#allocation3 + $0x40] sm:$0xff]
          %v657 = vlaneseq
          %v658 = vshrl.u32 %v657, 7
          %v659 = vsub.s32 0, %v658
          %v660 = vrot.slane %v646, %v659
          %v662 = vadd.f32 %v653, %v660
          %v663 = vadd.f32 %v654, %v660
          %v664 = vadd.f32 %v655, %v660
          %v665 = vmul.f32 %v647, %v647
          %v666 = vmul.f32 %v648, %v648
          %v667 = vmul.f32 %v649, %v649
          %v668 = vmul.f32 %v650, %v650
          %v669 = vmul.f32 %v651, %v651
          %v670 = vmul.f32 %v652, %v652
          %v671 = vadd.f32 %v665, %v668
          %v672 = vadd.f32 %v666, %v669
          %v673 = vadd.f32 %v667, %v670
          %v674 = vrsqrt.pop %v671
          %v675 = vmul.f32 %v671, %v674
          %vm676 = vcmp.eq.f32.partialorder %v671, inf
          %v677 = vsel %vm676, %v671, %v675
          %vm678 = vcmp.eq.f32.partialorder %v671, 0.0
          %v679 = vand.u32 %v671, 2147483648
          %v680 = vsel %vm678, %v679, %v677
          %v681 = vrsqrt.pop %v672
          %v682 = vmul.f32 %v672, %v681
          %vm683 = vcmp.eq.f32.partialorder %v672, inf
          %v684 = vsel %vm683, %v672, %v682
          %vm685 = vcmp.eq.f32.partialorder %v672, 0.0
          %v686 = vand.u32 %v672, 2147483648
          %v687 = vsel %vm685, %v686, %v684
          %v688 = vrsqrt.pop %v673
          %v689 = vmul.f32 %v673, %v688
          %vm690 = vcmp.eq.f32.partialorder %v673, inf
          %v691 = vsel %vm690, %v673, %v689
          %vm692 = vcmp.eq.f32.partialorder %v673, 0.0
          %v693 = vand.u32 %v673, 2147483648
          %v694 = vsel %vm692, %v693, %v691
          %v695 = vadd.f32 %v680, %v660
          %v696 = vadd.f32 %v687, %v660
          %v697 = vadd.f32 %v694, %v660
          %v698 = vmul.f32 %v695, 0.5
          %v699 = vmul.f32 %v696, 0.5
          %v700 = vmul.f32 %v697, 0.5
          %v701 = vmul.f32 %v662, 0.5
          %v702 = vmul.f32 %v663, 0.5
          %v703 = vmul.f32 %v664, 0.5
          %v704 = vadd.f32 %v698, %v701
          %v705 = vadd.f32 %v699, %v702
          %v706 = vadd.f32 %v700, %v703
          %707 = vst [vmem:[%s398] sm:$0xff] %v704
          %708 = vst [vmem:[%s398 + $0x8] sm:$0xff] %v705
          %709 = vst [vmem:[%s398 + $0x10] sm:$0xff] %v706
          %710 = vst [vmem:[%s405] sm:$0xff] %v647
          %711 = vst [vmem:[%s405 + $0x8] sm:$0xff] %v648
          %712 = vst [vmem:[%s405 + $0x10] sm:$0xff] %v649
          %vm713 = vcmp.lt.f32.partialorder %v650, 1e-08
          %vm714 = vcmp.lt.f32.partialorder %v651, 1e-08
          %vm715 = vcmp.lt.f32.partialorder %v652, 1e-08
          %vm716 = vcmp.gt.f32.partialorder %v650, -1e-08
          %vm717 = vcmp.gt.f32.partialorder %v651, -1e-08
          %vm718 = vcmp.gt.f32.partialorder %v652, -1e-08
          %vm719 = vmand %vm713, %vm716
          %vm720 = vmand %vm714, %vm717
          %vm721 = vmand %vm715, %vm718
          %v722 = vsel %vm719, 1e-08, %v650
          %v723 = vsel %vm720, 1e-08, %v651
          %v724 = vsel %vm721, 1e-08, %v652
          %725 = vst [vmem:[%s412] sm:$0xff] %v722
          %726 = vst [vmem:[%s412 + $0x8] sm:$0xff] %v723
          %727 = vst [vmem:[%s412 + $0x10] sm:$0xff] %v724
        $region56: #{tpu_custom_call.1} parent=35 // pred_fallthru
          _
        %s728 = sand.u32 %s169, 1
        %s729 = scalar_lea.sflag [#allocation6], %s728
        %s730 = sand.u32 %s169, 1
        %s731 = smul.addr %s730, 24
        %s732 = scalar_lea.vmem [#allocation10], %s731
        %s733 = sand.u32 %s30, 1
        %s734 = scalar_lea.sflag [#allocation12], %s733
        %s735 = sand.u32 %s197, 1
        %s736 = smul.addr %s735, 24
        %s737 = scalar_lea.vmem [#allocation11], %s736
        %s738 = sand.u32 %s30, 1
        %s739 = scalar_lea.sflag [#allocation12], %s738
        %s740 = sand.u32 %s225, 1
        %s741 = smul.addr %s740, 24
        %s742 = scalar_lea.vmem [#allocation13], %s741
        // Predicated region
        $region57: #{tpu_custom_call.1} parent=35 // pred_check
          %p743 = pneg %p179
        $region58: #{tpu_custom_call.1} parent=35 // pred_check_branch
          %745 = sbr.rel (%p743) target = $region60
        $region59: #{tpu_custom_call.1} parent=35 // pred_region
          %s746 = smul.u32 3, %s35
          %s748 = ssub.s32 384, 384
          %749 = vsyncadd %s729, %s748
          %s750 = smul.addr %s746, 2
          %s751 = sadd.s32 %s36, %s750
          %s752 = smul.addr %s751, 128
          %s753 = scalar_lea.hbm %s4, %s752
          %s754 = sshll.u32 %s732, 4
          %s755 = int_to_ptr.vmem [resolvable:$true] %s754
          %760 = dma.vmem_to_hbm [thread:$0]  %s755, 384, %s753, %s729, 128, 256, 8
        $region60: #{tpu_custom_call.1} parent=35 // pred_fallthru
          _
        // Predicated region
        $region61: #{tpu_custom_call.1} parent=35 // pred_check
          %p761 = pneg %p207
        $region62: #{tpu_custom_call.1} parent=35 // pred_check_branch
          %763 = sbr.rel (%p761) target = $region64
        $region63: #{tpu_custom_call.1} parent=35 // pred_region
          %s764 = smul.u32 3, %s35
          %s766 = ssub.s32 384, 384
          %767 = vsyncadd %s734, %s766
          %s768 = smul.addr %s764, 2
          %s769 = sadd.s32 %s36, %s768
          %s770 = smul.addr %s769, 128
          %s771 = scalar_lea.hbm %s5, %s770
          %s772 = sshll.u32 %s737, 4
          %s773 = int_to_ptr.vmem [resolvable:$true] %s772
          %778 = dma.vmem_to_hbm [thread:$0]  %s773, 384, %s771, %s734, 128, 256, 8
        $region64: #{tpu_custom_call.1} parent=35 // pred_fallthru
          _
        // Predicated region
        $region65: #{tpu_custom_call.1} parent=35 // pred_check
          %p779 = pneg %p235
        $region66: #{tpu_custom_call.1} parent=35 // pred_check_branch
          %781 = sbr.rel (%p779) target = $region68
        $region67: #{tpu_custom_call.1} parent=35 // pred_region
          %s782 = smul.u32 3, %s35
          %s784 = ssub.s32 384, 384
          %785 = vsyncadd %s739, %s784
          %s786 = smul.addr %s782, 2
          %s787 = sadd.s32 %s36, %s786
          %s788 = smul.addr %s787, 128
          %s789 = scalar_lea.hbm %s6, %s788
          %s790 = sshll.u32 %s742, 4
          %s791 = int_to_ptr.vmem [resolvable:$true] %s790
          %796 = dma.vmem_to_hbm [thread:$0]  %s791, 384, %s789, %s739, 128, 256, 8
        $region68: #{tpu_custom_call.1} parent=35 // pred_fallthru
          _
      $region36: #{tpu_custom_call.1} parent=5 // pred_fallthru
        _
      %p797 = scmp.le.s32.totalorder 2, %s25
      // Predicated region
      $region69: #{tpu_custom_call.1} parent=5 // pred_check
        %p798 = pneg %p797
      $region70: #{tpu_custom_call.1} parent=5 // pred_check_branch
        %800 = sbr.rel (%p798) target = $region72
      $region71: #{tpu_custom_call.1} parent=5 // pred_region
        %s801 = ssub.s32 %s25, 2
        // Predicated region
        $region73: #{tpu_custom_call.1} parent=71 // pred_check
          %p802 = pneg %p185
        $region74: #{tpu_custom_call.1} parent=71 // pred_check_branch
          %804 = sbr.rel (%p802) target = $region76
        $region75: #{tpu_custom_call.1} parent=71 // pred_region
          %s805 = sand.u32 %s170, 1
          %s806 = scalar_lea.sflag [#allocation6], %s805
          %s807 = sand.u32 %s170, 1
          %s808 = smul.addr %s807, 24
          %s809 = scalar_lea.vmem [#allocation10], %s808
          %810 = dma.done %s806, 384
        $region76: #{tpu_custom_call.1} parent=71 // pred_fallthru
          _
        // Predicated region
        $region77: #{tpu_custom_call.1} parent=71 // pred_check
          %p811 = pneg %p213
        $region78: #{tpu_custom_call.1} parent=71 // pred_check_branch
          %813 = sbr.rel (%p811) target = $region80
        $region79: #{tpu_custom_call.1} parent=71 // pred_region
          %s814 = sand.u32 %s31, 1
          %s815 = scalar_lea.sflag [#allocation12], %s814
          %s816 = sand.u32 %s198, 1
          %s817 = smul.addr %s816, 24
          %s818 = scalar_lea.vmem [#allocation11], %s817
          %819 = dma.done %s815, 384
        $region80: #{tpu_custom_call.1} parent=71 // pred_fallthru
          _
        // Predicated region
        $region81: #{tpu_custom_call.1} parent=71 // pred_check
          %p820 = pneg %p241
        $region82: #{tpu_custom_call.1} parent=71 // pred_check_branch
          %822 = sbr.rel (%p820) target = $region84
        $region83: #{tpu_custom_call.1} parent=71 // pred_region
          %s823 = sand.u32 %s31, 1
          %s824 = scalar_lea.sflag [#allocation12], %s823
          %s825 = sand.u32 %s226, 1
          %s826 = smul.addr %s825, 24
          %s827 = scalar_lea.vmem [#allocation13], %s826
          %828 = dma.done %s824, 384
        $region84: #{tpu_custom_call.1} parent=71 // pred_fallthru
          _
      $region72: #{tpu_custom_call.1} parent=5 // pred_fallthru
        _
    $region6: #{tpu_custom_call.1} parent=1 // loop_footer
      %s29 = sadd.s32 1, %s25
    $region7: #{tpu_custom_call.1} parent=1 // loop_footer_branch
      %24 = sbr.rel target = $region3
    $region8: #{tpu_custom_call.1} parent=1 // loop_exit
      _
    %829 = vsyncpa [#allocation5], 1
    %s830 = scalar_lea.sflag [#allocation5], 1
    %831 = vsyncpa %s830, 1
    %832 = vsyncpa [#allocation8], 1
    %s833 = scalar_lea.sflag [#allocation8], 1
    %834 = vsyncpa %s833, 1
    %835 = vsyncpa [#allocation6], 1
    %s836 = scalar_lea.sflag [#allocation6], 1
    %837 = vsyncpa %s836, 1
    %838 = vsyncpa [#allocation12], 1
    %s839 = scalar_lea.sflag [#allocation12], 1
    %840 = vsyncpa %s839, 1

</llo_original>
